<compile_context>
chip_gen: v7x
topology: tpu7x:2x2x1
jax: 0.10.0
libtpu: 0.0.40
codegen_flags: <defaults>
</compile_context>

<pallas_src>
import functools
from typing import NamedTuple

import jax
import jax.numpy as jnp
from jax.experimental import pallas as pl
from jax.experimental.pallas import tpu as pltpu


def _round_up(x, m):
    return ((x + m - 1) // m) * m


# --------------------------------------------------------------------------
# Kernel: one (tm, K_pad) x-tile  @  (K_pad, tn) resident weight tile.
# Cast of x to the MXU compute dtype happens in-kernel (VPU), bias add and the
# single downcast to the output dtype happen in the f32 epilogue.
# --------------------------------------------------------------------------
def _linear_kernel(x_ref, w_ref, b_ref, o_ref, *, compute_dtype):
    x = x_ref[...].astype(compute_dtype)
    acc = jnp.dot(x, w_ref[...], preferred_element_type=jnp.float32)
    o_ref[...] = (acc + b_ref[...]).astype(o_ref.dtype)


# --------------------------------------------------------------------------
# One-time parameter preparation (hoisted out of the per-call path).
# --------------------------------------------------------------------------
class PatchEmbeddingParams(NamedTuple):
    weight: jax.Array        # (K_pad, F_pad), compute dtype, already W^T
    bias: jax.Array          # (1, F_pad), float32
    in_channels: int
    embed_size: int


def prepare_patch_embedding_params(weight, bias, *, compute_dtype=jnp.bfloat16):
    """weight: (E, C_in) PyTorch Linear layout, bias: (E,). Do this once."""
    E, Cin = weight.shape
    assert bias.shape == (E,)
    K_pad = _round_up(Cin, 128)   # lane-dense contraction dim
    F_pad = _round_up(E, 128)     # lane-dense output stores
    w_p = jnp.zeros((K_pad, F_pad), dtype=compute_dtype)
    w_p = w_p.at[:Cin, :E].set(weight.T.astype(compute_dtype))
    b_p = jnp.zeros((1, F_pad), dtype=jnp.float32)
    b_p = b_p.at[0, :E].set(bias.astype(jnp.float32))
    return PatchEmbeddingParams(w_p, b_p, Cin, E)


def _pick_tn(F_pad, limit):
    """Largest lane-dense divisor of F_pad that is <= limit."""
    if F_pad <= limit:
        return F_pad
    for cand in (2048, 1792, 1536, 1280, 1024, 896, 768, 640, 512, 384, 256, 128):
        if cand <= limit and F_pad % cand == 0:
            return cand
    return 128


# --------------------------------------------------------------------------
# Forward pass.
# --------------------------------------------------------------------------
def patch_embedding(x, params, *, tm=512, tn_max=2048,
                    vmem_budget_bytes=10 * 1024 * 1024):
    """x: (B, N, C_in), params: PatchEmbeddingParams. Returns (B, N, E) in
    x.dtype. MXU runs in params.weight.dtype with f32 accumulation."""
    assert x.ndim == 3, "PatchEmbedding expects a 3D input (B, N, C_in)"
    B, N, Cin = x.shape
    assert Cin == params.in_channels
    E = params.embed_size
    w_p, b_p = params.weight, params.bias
    K_pad, F_pad = w_p.shape
    compute_dtype = w_p.dtype
    out_dtype = x.dtype
    M = B * N

    # x stays in its native dtype; only a zero K-tail pad when C_in % 128 != 0
    # (fused by XLA).  No M padding: Pallas handles the ragged last M block.
    x_flat = x.reshape(M, Cin)
    if K_pad != Cin:
        x_flat = jnp.pad(x_flat, ((0, 0), (0, K_pad - Cin)))

    x_bytes = jnp.dtype(x.dtype).itemsize
    c_bytes = jnp.dtype(compute_dtype).itemsize
    o_bytes = jnp.dtype(out_dtype).itemsize

    # ---- tile selection under an explicit VMEM budget ---------------------
    tn = _pick_tn(F_pad, tn_max)
    # tm: 256-multiple by default (MXU-friendly), rounded to 16 (bf16 sublane
    # packing); never larger than needed for small M.
    tm_eff = min(_round_up(max(tm, 16), 16), max(16, (M // 16) * 16))

    def vmem_bytes(tm_, tn_):
        # double-buffered x and out, weight counted double-buffered too
        # (conservative), bias padded to 8 sublanes.
        return (2 * tm_ * K_pad * x_bytes
                + 2 * K_pad * tn_ * c_bytes
                + 2 * 8 * tn_ * 4
                + 2 * tm_ * tn_ * o_bytes)

    while vmem_bytes(tm_eff, tn) > vmem_budget_bytes and tm_eff > 16:
        tm_eff = max(16, _round_up(tm_eff // 2, 16))
    while vmem_bytes(tm_eff, tn) > vmem_budget_bytes and tn > 128:
        tn = _pick_tn(F_pad, tn // 2)

    Mt = pl.cdiv(M, tm_eff)
    Ft = F_pad // tn
    grid = (Mt, Ft)

    # Weight is streamed once when resident (Ft == 1); re-streamed per M tile
    # only in the very-wide-E fallback.
    w_reads = 1 if Ft == 1 else Mt * Ft
    cost = pl.CostEstimate(
        flops=2 * M * K_pad * F_pad,
        transcendentals=0,
        bytes_accessed=(M * K_pad * x_bytes
                        + w_reads * K_pad * tn * c_bytes
                        + F_pad * 4
                        + M * F_pad * o_bytes),
    )

    kernel = functools.partial(_linear_kernel, compute_dtype=compute_dtype)

    y = pl.pallas_call(
        kernel,
        out_shape=jax.ShapeDtypeStruct((M, F_pad), out_dtype),
        grid_spec=pltpu.PrefetchScalarGridSpec(
            num_scalar_prefetch=0,
            grid=grid,
            in_specs=[
                pl.BlockSpec((tm_eff, K_pad), lambda i, j: (i, 0)),   # x tile
                pl.BlockSpec((K_pad, tn), lambda i, j: (0, j)),       # weight
                pl.BlockSpec((1, tn), lambda i, j: (0, j)),           # bias
            ],
            out_specs=pl.BlockSpec((tm_eff, tn), lambda i, j: (i, j)),
        ),
        compiler_params=pltpu.CompilerParams(
            dimension_semantics=("parallel", "parallel")),
        cost_estimate=cost,
    )(x_flat, w_p, b_p)

    if F_pad != E:
        y = y[:, :E]
    return y.reshape(B, N, E)


def _reference(x, weight, bias):
    """Pure-JAX reference mirroring the PyTorch module."""
    return jnp.einsum("bnc,ec->bne", x, weight) + bias


if __name__ == "__main__":
    # ---- case 1: small shapes consistent with the module -------------------
    B, N, Cin, E = 2, 8, 48, 32
    key = jax.random.PRNGKey(0)
    kx, kw, kb = jax.random.split(key, 3)
    x = jax.random.normal(kx, (B, N, Cin), dtype=jnp.float32)
    weight = jax.random.normal(kw, (E, Cin), dtype=jnp.float32) * 0.05
    bias = jax.random.normal(kb, (E,), dtype=jnp.float32) * 0.05

    # Parameter prep hoisted out of the forward path (done once).
    params_bf16 = prepare_patch_embedding_params(weight, bias)
    params_f32 = prepare_patch_embedding_params(weight, bias,
                                                compute_dtype=jnp.float32)

    out_bf16 = jax.block_until_ready(patch_embedding(x, params_bf16))
    out_f32 = jax.block_until_ready(patch_embedding(x, params_f32))

    ref = _reference(x, weight, bias)
    ref_bf = _reference(x.astype(jnp.bfloat16).astype(jnp.float32),
                        weight.astype(jnp.bfloat16).astype(jnp.float32), bias)

    assert out_bf16.shape == (B, N, E) and out_bf16.dtype == x.dtype
    assert out_f32.shape == (B, N, E)
    assert jnp.allclose(out_f32, ref, atol=1e-4, rtol=1e-4)
    assert jnp.allclose(out_bf16, ref_bf, atol=1e-4, rtol=1e-4)
    assert jnp.allclose(out_bf16, ref, atol=5e-2, rtol=5e-2)

    # ---- case 2: lane-aligned C_in/E (no pad path) + ragged last M block ---
    B2, N2, C2, E2 = 2, 100, 128, 128
    kx2, kw2, kb2 = jax.random.split(jax.random.PRNGKey(1), 3)
    x2 = jax.random.normal(kx2, (B2, N2, C2), dtype=jnp.float32)
    w2 = jax.random.normal(kw2, (E2, C2), dtype=jnp.float32) * 0.02
    b2 = jax.random.normal(kb2, (E2,), dtype=jnp.float32) * 0.02
    params2 = prepare_patch_embedding_params(w2, b2)
    # tm=64 with M=200 -> grid of 4 M tiles, last one ragged (8 valid rows).
    out2 = jax.block_until_ready(patch_embedding(x2, params2, tm=64))
    ref2_bf = _reference(x2.astype(jnp.bfloat16).astype(jnp.float32),
                         w2.astype(jnp.bfloat16).astype(jnp.float32), b2)
    assert out2.shape == (B2, N2, E2) and out2.dtype == x2.dtype
    assert jnp.allclose(out2, ref2_bf, atol=1e-3, rtol=1e-3)

    print("KERNEL_OK")
</pallas_src>

<mosaic_0001>
module attributes {stable_mosaic.version = 11 : i64} {
  func.func @_linear_kernel(%arg0: i32, %arg1: i32, %arg2: memref<16x128xf32, #tpu.memory_space<vmem>>, %arg3: memref<128x128xbf16, #tpu.memory_space<vmem>>, %arg4: memref<1x128xf32, #tpu.memory_space<vmem>>, %arg5: memref<16x128xf32, #tpu.memory_space<vmem>>) attributes {dimension_semantics = [#tpu.dimension_semantics<parallel>, #tpu.dimension_semantics<parallel>], iteration_bounds = array<i64: 1, 1>, scalar_prefetch = 0 : i64, scratch_operands = 0 : i64, tpu.core_type = #tpu.core_type<tc>, window_params = [{transform_indices = @transform_0, window_bounds = array<i64: 16, 128>}, {transform_indices = @transform_1, window_bounds = array<i64: 128, 128>}, {transform_indices = @transform_2, window_bounds = array<i64: 1, 128>}, {transform_indices = @transform_3, window_bounds = array<i64: 16, 128>}]} {
    %c0 = arith.constant 0 : index
    %c0_0 = arith.constant 0 : index
    %0 = vector.load %arg2[%c0, %c0_0] : memref<16x128xf32, #tpu.memory_space<vmem>>, vector<16x128xf32>
    %1 = arith.truncf %0 : vector<16x128xf32> to vector<16x128xbf16>
    %c0_1 = arith.constant 0 : index
    %c0_2 = arith.constant 0 : index
    %2 = vector.load %arg3[%c0_1, %c0_2] : memref<128x128xbf16, #tpu.memory_space<vmem>>, vector<128x128xbf16>
    %cst = arith.constant dense<0.000000e+00> : vector<16x128xf32>
    %3 = tpu.matmul %1, %2, %cst {dimension_numbers = #tpu.dot_dimension_numbers<[1], [0], [0], [1], [0, 0, 1, 1], [], []>} : vector<16x128xbf16>, vector<128x128xbf16>, vector<16x128xf32> -> vector<16x128xf32>
    %c0_3 = arith.constant 0 : index
    %c0_4 = arith.constant 0 : index
    %4 = vector.load %arg4[%c0_3, %c0_4] : memref<1x128xf32, #tpu.memory_space<vmem>>, vector<1x128xf32>
    %5 = vector.broadcast %4 : vector<1x128xf32> to vector<16x128xf32>
    %6 = arith.addf %3, %5 : vector<16x128xf32>
    %c0_5 = arith.constant 0 : index
    %c0_6 = arith.constant 0 : index
    %7 = vector.load %arg5[%c0_5, %c0_6] : memref<16x128xf32, #tpu.memory_space<vmem>>, vector<16x128xf32>
    tpu.vector_store %arg5[%c0_5, %c0_6], %6 {strides = array<i32>} : memref<16x128xf32, #tpu.memory_space<vmem>>, vector<16x128xf32>,
    return
  }
  func.func @transform_0(%arg0: i32, %arg1: i32) -> (i32, i32) {
    %c0_i32 = arith.constant 0 : i32
    %c0_i32_0 = arith.constant 0 : i32
    return %arg0, %c0_i32 : i32, i32
  }
  func.func @transform_1(%arg0: i32, %arg1: i32) -> (i32, i32) {
    %c0_i32 = arith.constant 0 : i32
    %c0_i32_0 = arith.constant 0 : i32
    return %c0_i32, %arg1 : i32, i32
  }
  func.func @transform_2(%arg0: i32, %arg1: i32) -> (i32, i32) {
    %c0_i32 = arith.constant 0 : i32
    %c0_i32_0 = arith.constant 0 : i32
    return %c0_i32, %arg1 : i32, i32
  }
  func.func @transform_3(%arg0: i32, %arg1: i32) -> (i32, i32) {
    %c0_i32 = arith.constant 0 : i32
    return %arg0, %arg1 : i32, i32
  }
}

</mosaic_0001>

<llo_original>
// kernel: tpu_custom_call.1
$region0: #{tpu_custom_call.1}
  #allocation0 [shape = 'u32[]', space=smem, size = 0x4, offset = 0x4, fixed_abs, tag = 'smem constant byte address 0x4 - core index']
  #allocation1 [shape = 'u32[144,128]{1,0:T(1,128)}', space=vmem, size = 0x12000, scoped, tag = 'internal scratch']
  %s0 = inlined_call_operand.hbm [shape: f32[16,128], index: 0, kind: input, shape index: {}]
  %s1 = inlined_call_operand.hbm [shape: bf16[128,128], index: 1, kind: input, shape index: {}]
  %s2 = inlined_call_operand.vmem [shape: f32[1,128], index: 2, kind: input, shape index: {}]
  %s3 = inlined_call_operand.hbm [shape: f32[16,128], index: 3, kind: output, shape index: {}]
  %s4 = sld [smem:[#allocation0]]
  $region30: #{tpu_custom_call.1} parent=0
    _
  %s6 = ssub.s32 1, %s4
  %s7 = scalar_select 0, %s6, %s4
  $region1: #{tpu_custom_call.1} parent=0
    #allocation2 [shape = 'u8[8192]{0}', space=vmem, size = 0x2000, scoped, tag = 'input window, operand 0, single buffered']
    #allocation3 [shape = 's32[1]{0}', space=sflag, size = 0x4, scoped, tag = 'scoped memory for tpu_custom_call.1']
    #allocation4 [shape = 's32[1]{0}', space=sflag, size = 0x4, scoped, tag = 'scoped memory for tpu_custom_call.1']
    #allocation5 [shape = 'u8[32768]{0}', space=vmem, size = 0x8000, scoped, tag = 'input window, operand 1, single buffered']
    #allocation6 [shape = 's32[1]{0}', space=sflag, size = 0x4, scoped, tag = 'scoped memory for tpu_custom_call.1']
    #allocation7 [shape = 'u8[8192]{0}', space=vmem, size = 0x2000, scoped, tag = 'output window, operand 0, single buffered']
    %8 = vsyncpa [#allocation3], 0
    %9 = vsyncpa [#allocation6], 0
    %10 = vsyncpa [#allocation4], 0
    // Predicated region
    $region2: #{tpu_custom_call.1} parent=1 // pred_check
      _
    $region3: #{tpu_custom_call.1} parent=1 // pred_check_branch
      %12 = sbr.rel (0) target = $region5
    $region4: #{tpu_custom_call.1} parent=1 // pred_region
      %s14 = ssub.s32 256, 256
      %15 = vsyncadd [#allocation3], %s14
      %s16 = sshll.u32 [#allocation2], 4
      %s17 = int_to_ptr.vmem [resolvable:$true] %s16
      %22 = dma.hbm_to_vmem [thread:$0]  %s0, 256, %s17, [#allocation3], 128, 128, 8
    $region5: #{tpu_custom_call.1} parent=1 // pred_fallthru
      _
    // Predicated region
    $region6: #{tpu_custom_call.1} parent=1 // pred_check
      _
    $region7: #{tpu_custom_call.1} parent=1 // pred_check_branch
      %24 = sbr.rel (0) target = $region9
    $region8: #{tpu_custom_call.1} parent=1 // pred_region
      %s26 = ssub.s32 1024, 1024
      %27 = vsyncadd [#allocation6], %s26
      %s28 = sshll.u32 [#allocation5], 4
      %s29 = int_to_ptr.vmem [resolvable:$true] %s28
      %34 = dma.hbm_to_vmem [thread:$0]  %s1, 1024, %s29, [#allocation6], 64, 64, 4
    $region9: #{tpu_custom_call.1} parent=1 // pred_fallthru
      _
    // Predicated region
    $region10: #{tpu_custom_call.1} parent=1 // pred_check
      _
    $region11: #{tpu_custom_call.1} parent=1 // pred_check_branch
      %36 = sbr.rel (0) target = $region13
    $region12: #{tpu_custom_call.1} parent=1 // pred_region
      _
    $region13: #{tpu_custom_call.1} parent=1 // pred_fallthru
      _
    // Predicated region
    $region14: #{tpu_custom_call.1} parent=1 // pred_check
      _
    $region15: #{tpu_custom_call.1} parent=1 // pred_check_branch
      %38 = sbr.rel (0) target = $region17
    $region16: #{tpu_custom_call.1} parent=1 // pred_region
      %39 = dma.done [#allocation3], 256
    $region17: #{tpu_custom_call.1} parent=1 // pred_fallthru
      _
    // Predicated region
    $region18: #{tpu_custom_call.1} parent=1 // pred_check
      _
    $region19: #{tpu_custom_call.1} parent=1 // pred_check_branch
      %41 = sbr.rel (0) target = $region21
    $region20: #{tpu_custom_call.1} parent=1 // pred_region
      %42 = dma.done [#allocation6], 1024
    $region21: #{tpu_custom_call.1} parent=1 // pred_fallthru
      _
    %v44 = vld [vmem:[#allocation2] sm:$0xff]
    %v45 = vld [vmem:[#allocation2 + $0x8] sm:$0xff]
    %v46 = vpack.c.bf16 %v45, %v44
    %v47 = vld [vmem:[#allocation5] sm:$0xf]
    %v48 = vld [vmem:[#allocation5 + $0x4] sm:$0xf]
    %v49 = vld [vmem:[#allocation5 + $0x8] sm:$0xf]
    %v50 = vld [vmem:[#allocation5 + $0xc] sm:$0xf]
    %v51 = vld [vmem:[#allocation5 + $0x10] sm:$0xf]
    %v52 = vld [vmem:[#allocation5 + $0x14] sm:$0xf]
    %v53 = vld [vmem:[#allocation5 + $0x18] sm:$0xf]
    %v54 = vld [vmem:[#allocation5 + $0x1c] sm:$0xf]
    %v55 = vld [vmem:[#allocation5 + $0x20] sm:$0xf]
    %v56 = vld [vmem:[#allocation5 + $0x24] sm:$0xf]
    %v57 = vld [vmem:[#allocation5 + $0x28] sm:$0xf]
    %v58 = vld [vmem:[#allocation5 + $0x2c] sm:$0xf]
    %v59 = vld [vmem:[#allocation5 + $0x30] sm:$0xf]
    %v60 = vld [vmem:[#allocation5 + $0x34] sm:$0xf]
    %v61 = vld [vmem:[#allocation5 + $0x38] sm:$0xf]
    %v62 = vld [vmem:[#allocation5 + $0x3c] sm:$0xf]
    %v63 = vld [vmem:[%s2] sm:$0x1]
    %v65 = vlaneseq
    %v66 = vshrl.u32 %v65, 7
    %v67 = vsub.s32 0, %v66
    %v68 = vrot.slane %v63, %v67
    %v86 = vunpack.c.l.b16 %v47
    %v87 = vunpack.c.l.b16 %v48
    %v88 = vunpack.c.l.b16 %v49
    %v89 = vunpack.c.l.b16 %v50
    %v90 = vunpack.c.l.b16 %v51
    %v91 = vunpack.c.l.b16 %v52
    %v92 = vunpack.c.l.b16 %v53
    %v93 = vunpack.c.l.b16 %v54
    %v94 = vunpack.c.l.b16 %v55
    %v95 = vunpack.c.l.b16 %v56
    %v96 = vunpack.c.l.b16 %v57
    %v97 = vunpack.c.l.b16 %v58
    %v98 = vunpack.c.l.b16 %v59
    %v99 = vunpack.c.l.b16 %v60
    %v100 = vunpack.c.l.b16 %v61
    %v101 = vunpack.c.l.b16 %v62
    %v102 = vpack.c.b16 %v87, %v86
    %v103 = vpack.c.b16 %v89, %v88
    %v104 = vpack.c.b16 %v91, %v90
    %v105 = vpack.c.b16 %v93, %v92
    %v106 = vpack.c.b16 %v95, %v94
    %v107 = vpack.c.b16 %v97, %v96
    %v108 = vpack.c.b16 %v99, %v98
    %v109 = vpack.c.b16 %v101, %v100
    %118 = vmatprep.subr.bf16.mxu0 0
    %119 = vmatpush1.bf16.msra.mxu0 %v102
    %120 = vmatprep.subr.bf16.mxu0 0
    %121 = vmatpush1.bf16.msra.mxu0 %v103
    %122 = vmatprep.subr.bf16.mxu0 0
    %123 = vmatpush1.bf16.msra.mxu0 %v104
    %124 = vmatprep.subr.bf16.mxu0 0
    %125 = vmatpush1.bf16.msra.mxu0 %v105
    %126 = vmatprep.subr.bf16.mxu0 0
    %127 = vmatpush1.bf16.msra.mxu0 %v106
    %128 = vmatprep.subr.bf16.mxu0 0
    %129 = vmatpush1.bf16.msra.mxu0 %v107
    %130 = vmatprep.subr.bf16.mxu0 0
    %131 = vmatpush1.bf16.msra.mxu0 %v108
    %132 = vmatprep.subr.bf16.mxu0 0
    %133 = vmatpush1.bf16.msra.mxu0 %v109
    %134 = vmatprep.subr.bf16.mxu0 0
    %135 = vmatpush1.bf16.msra.mxu0 0
    %136 = vmatprep.subr.bf16.mxu0 0
    %137 = vmatpush1.bf16.msra.mxu0 0
    %138 = vmatprep.subr.bf16.mxu0 0
    %139 = vmatpush1.bf16.msra.mxu0 0
    %140 = vmatprep.subr.bf16.mxu0 0
    %141 = vmatpush1.bf16.msra.mxu0 0
    %142 = vmatprep.subr.bf16.mxu0 0
    %143 = vmatpush1.bf16.msra.mxu0 0
    %144 = vmatprep.subr.bf16.mxu0 0
    %145 = vmatpush1.bf16.msra.mxu0 0
    %146 = vmatprep.subr.bf16.mxu0 0
    %147 = vmatpush1.bf16.msra.mxu0 0
    %148 = vmatprep.subr.bf16.mxu0 0
    %149 = vmatpush1.bf16.msra.mxu0 0
    %150 = vmatprep.mubr.bf16.mxu0 0
    %151 = vmatmul.mubr.bf16.gmra.mrb[0].mxu0 %v46
    %v152 = vpop.f32.mrb[0].mxu0
    %v153 = vadd.f32 %v68, %v152
    %v154 = vpop.f32.mrb[0].mxu0
    %v155 = vpop.f32.mrb[0].mxu0
    %v156 = vadd.f32 %v68, %v155
    %v157 = vpop.f32.mrb[0].mxu0
    %158 = vdwg.mxu0
    %159 = vst [vmem:[#allocation7] sm:$0xff] %v153
    %160 = vst [vmem:[#allocation7 + $0x8] sm:$0xff] %v156
    // Predicated region
    $region22: #{tpu_custom_call.1} parent=1 // pred_check
      _
    $region23: #{tpu_custom_call.1} parent=1 // pred_check_branch
      %162 = sbr.rel (0) target = $region25
    $region24: #{tpu_custom_call.1} parent=1 // pred_region
      %s164 = ssub.s32 256, 256
      %165 = vsyncadd [#allocation4], %s164
      %s166 = sshll.u32 [#allocation7], 4
      %s167 = int_to_ptr.vmem [resolvable:$true] %s166
      %172 = dma.vmem_to_hbm [thread:$0]  %s167, 256, %s3, [#allocation4], 128, 128, 8
    $region25: #{tpu_custom_call.1} parent=1 // pred_fallthru
      _
    // Predicated region
    $region26: #{tpu_custom_call.1} parent=1 // pred_check
      _
    $region27: #{tpu_custom_call.1} parent=1 // pred_check_branch
      %174 = sbr.rel (0) target = $region29
    $region28: #{tpu_custom_call.1} parent=1 // pred_region
      %175 = dma.done [#allocation4], 256
    $region29: #{tpu_custom_call.1} parent=1 // pred_fallthru
      _
    %176 = vsyncpa [#allocation3], 1
    %177 = vsyncpa [#allocation6], 1
    %178 = vsyncpa [#allocation4], 1

</llo_original>
